<compile_context>
chip_gen: v7x
topology: tpu7x:2x2x1
jax: 0.10.0
libtpu: 0.0.40
codegen_flags: <defaults>
</compile_context>

<pallas_src>
import functools

import jax
import jax.numpy as jnp
import numpy as np
from jax.experimental import pallas as pl
from jax.experimental.pallas import tpu as pltpu


_SMALL_MAP_ELEMS = 128 * 1024          # below this, plain XLA beats a kernel launch
_TARGET_BLOCK_BYTES = 2 * 1024 * 1024  # ~2 MiB/block ≈ 85% of HBM write roofline;
                                       # double-buffered stays far under the 32 MiB
                                       # scoped-VMEM default on v5e/v6e/v7x


def _patch_segment_kernel(row_ref, col_ref, seg_ref, *, th):
    # row_ref: (H_pad, 1) VMEM-resident LUT = floor(i*ph/H) * pw
    # col_ref: (1,  W)    VMEM-resident LUT = floor(j*pw/W)
    # seg_ref: (th, W)    output tile (batch/channel dims squeezed by BlockSpec)
    t = pl.program_id(1)
    start = t * th
    if th % 8 == 0:
        start = pl.multiple_of(start, 8)
    seg_ref[...] = row_ref[pl.ds(start, th), :] + col_ref[...]


def _pick_row_tile(H, W, itemsize):
    """Byte-budget-aware H tile: ~_TARGET_BLOCK_BYTES per output block, a multiple
    of 8, and (when H permits) small enough that there are >=2 H tiles so the
    'parallel' axis has work for both v7x TensorCores even at B=1."""
    if H <= 8:
        return H
    budget_rows = max(8, (_TARGET_BLOCK_BYTES // max(1, W * itemsize)) // 8 * 8)
    two_tile_cap = max(8, ((H - 1) // 8) * 8)   # < H and a multiple of 8
    return min(budget_rows, two_tile_cap)


def patch_segmenter(x, sz=(16, 16), out_dtype=jnp.int32, force_pallas=False):
    """Pallas equivalent of PatchSegmenter(sz)(x).segments.

    x: (B, C, H, W) array — only its shape is used (never read / never DMA'd).
    returns: (B, 1, H, W) segment-id map in `out_dtype` (default int32).
    """
    if isinstance(sz, int):
        sz = (sz, sz)
    ph, pw = sz
    B, _, H, W = x.shape
    out_dtype = jnp.dtype(out_dtype)

    # TODO(synk): torch returns dtype=int64 segment ids; TPU has no 64-bit vector
    # path, so we default to int32 (int16/uint8 also valid when ph*pw fits) —
    # cast downstream if strictly required.
    # TODO(synk): we use exact integer floor((i*ph)//H); torch's
    # F.interpolate(mode='nearest') uses float scale ph/H, which can differ by 1
    # at a patch boundary for pathological non-power-of-two shapes.

    if (not force_pallas) and H * W < _SMALL_MAP_ELEMS:
        # Tiny map: skip the kernel launch entirely; XLA fuses this into consumers.
        r = (jnp.arange(H, dtype=jnp.int32) * ph) // H * pw
        c = (jnp.arange(W, dtype=jnp.int32) * pw) // W
        seg = (r[:, None] + c[None, :]).astype(out_dtype)
        return jnp.broadcast_to(seg[None, None], (B, 1, H, W))

    itemsize = out_dtype.itemsize
    th = _pick_row_tile(H, W, itemsize)
    nt = pl.cdiv(H, th)
    H_pad = nt * th  # pad the row LUT so the in-kernel dynamic slice never goes OOB

    # Tiny 1-D lookup tables (computed in int32, stored in the output dtype).
    rows = jnp.minimum(jnp.arange(H_pad, dtype=jnp.int32), H - 1)
    row_lut = ((rows * ph) // H * pw).astype(out_dtype).reshape(H_pad, 1)
    col_lut = ((jnp.arange(W, dtype=jnp.int32) * pw) // W).astype(out_dtype).reshape(1, W)

    kernel = functools.partial(_patch_segment_kernel, th=th)

    # TODO(synk): the module also returns an empty group-assoc dict inside
    # SegmenterOutput; we return only the segments tensor.
    return pl.pallas_call(
        kernel,
        out_shape=jax.ShapeDtypeStruct((B, 1, H, W), out_dtype),
        grid=(B, nt),
        in_specs=[
            # Untiled, constant-block-index LUTs: DMA'd once, VMEM-resident.
            pl.BlockSpec((H_pad, 1), lambda b, t: (0, 0)),
            pl.BlockSpec((1, W), lambda b, t: (0, 0)),
        ],
        # Batched output written directly; full-W blocks keep stores lane-dense.
        out_specs=pl.BlockSpec((None, None, th, W), lambda b, t: (b, 0, t, 0)),
        compiler_params=pltpu.CompilerParams(
            dimension_semantics=("parallel", "parallel")
        ),
        cost_estimate=pl.CostEstimate(
            flops=B * H * W,
            transcendentals=0,
            bytes_accessed=B * H * W * itemsize + (H_pad + W) * itemsize,
        ),
    )(row_lut, col_lut)


def _reference(x, sz):
    """Pure numpy reference mirroring the PyTorch forward."""
    ph, pw = sz
    B, _, H, W = x.shape
    i = np.arange(H)
    j = np.arange(W)
    src_r = np.floor(i * (ph / H)).astype(np.int64)
    src_c = np.floor(j * (pw / W)).astype(np.int64)
    seg = src_r[:, None] * pw + src_c[None, :]
    return np.broadcast_to(seg[None, None, :, :], (B, 1, H, W))


if __name__ == "__main__":
    key = jax.random.PRNGKey(0)
    x = jax.random.normal(key, (2, 4, 16, 16), dtype=jnp.float32)
    sz = (4, 4)  # each patch-index cell covers a 4x4 region of the 16x16 input

    # Force the Pallas path (the 16x16 map would otherwise take the tiny-map
    # XLA fallback), and also check the fallback path for agreement.
    seg = jax.block_until_ready(patch_segmenter(x, sz=sz, force_pallas=True))
    seg_fallback = jax.block_until_ready(patch_segmenter(x, sz=sz))

    expected = _reference(np.asarray(x), sz)
    assert seg.shape == (2, 1, 16, 16), seg.shape
    assert seg.dtype == jnp.int32, seg.dtype
    np.testing.assert_array_equal(np.asarray(seg).astype(np.int64), expected)
    np.testing.assert_array_equal(np.asarray(seg_fallback).astype(np.int64), expected)

    print("KERNEL_OK")
</pallas_src>

<mosaic_0001>
module attributes {stable_mosaic.version = 11 : i64} {
  func.func @_patch_segment_kernel(%arg0: i32, %arg1: i32, %arg2: memref<16x1xi32, #tpu.memory_space<vmem>>, %arg3: memref<1x16xi32, #tpu.memory_space<vmem>>, %arg4: memref<1x1x8x16xi32, #tpu.memory_space<vmem>>) attributes {dimension_semantics = [#tpu.dimension_semantics<parallel>, #tpu.dimension_semantics<parallel>], iteration_bounds = array<i64: 2, 2>, scalar_prefetch = 0 : i64, scratch_operands = 0 : i64, tpu.core_type = #tpu.core_type<tc>, window_params = [{pipeline_mode = #tpu.pipeline_mode<synchronous>, transform_indices = @transform_0, window_bounds = array<i64: 16, 1>}, {pipeline_mode = #tpu.pipeline_mode<synchronous>, transform_indices = @transform_1, window_bounds = array<i64: 1, 16>}, {transform_indices = @transform_2, window_bounds = array<i64: 1, 1, 8, 16>}]} {
    %c8_i32 = arith.constant 8 : i32
    %0 = arith.muli %arg1, %c8_i32 : i32
    %1 = tpu.assume_multiple %0, 8 : i32
    %2 = arith.index_cast %1 : i32 to index
    %c0 = arith.constant 0 : index
    %3 = vector.load %arg2[%2, %c0] : memref<16x1xi32, #tpu.memory_space<vmem>>, vector<8x1xi32>
    %c0_0 = arith.constant 0 : index
    %c0_1 = arith.constant 0 : index
    %4 = vector.load %arg3[%c0_0, %c0_1] : memref<1x16xi32, #tpu.memory_space<vmem>>, vector<1x16xi32>
    %5 = vector.broadcast %3 : vector<8x1xi32> to vector<8x16xi32>
    %6 = vector.broadcast %4 : vector<1x16xi32> to vector<8x16xi32>
    %7 = arith.addi %5, %6 : vector<8x16xi32>
    %c0_2 = arith.constant 0 : index
    %c0_3 = arith.constant 0 : index
    %c0_4 = arith.constant 0 : index
    %c0_5 = arith.constant 0 : index
    %8 = vector.load %arg4[%c0_2, %c0_3, %c0_4, %c0_5] : memref<1x1x8x16xi32, #tpu.memory_space<vmem>>, vector<1x1x8x16xi32>
    %9 = vector.shape_cast %8 : vector<1x1x8x16xi32> to vector<8x16xi32>
    %10 = vector.shape_cast %7 : vector<8x16xi32> to vector<1x1x8x16xi32>
    tpu.vector_store %arg4[%c0_2, %c0_3, %c0_4, %c0_5], %10 {strides = array<i32>} : memref<1x1x8x16xi32, #tpu.memory_space<vmem>>, vector<1x1x8x16xi32>,
    return
  }
  func.func @transform_0(%arg0: i32, %arg1: i32) -> (i32, i32) {
    %c0_i32 = arith.constant 0 : i32
    %c0_i32_0 = arith.constant 0 : i32
    %c0_i32_1 = arith.constant 0 : i32
    return %c0_i32, %c0_i32_0 : i32, i32
  }
  func.func @transform_1(%arg0: i32, %arg1: i32) -> (i32, i32) {
    %c0_i32 = arith.constant 0 : i32
    %c0_i32_0 = arith.constant 0 : i32
    %c0_i32_1 = arith.constant 0 : i32
    return %c0_i32, %c0_i32_0 : i32, i32
  }
  func.func @transform_2(%arg0: i32, %arg1: i32) -> (i32, i32, i32, i32) {
    %c0_i32 = arith.constant 0 : i32
    %c0_i32_0 = arith.constant 0 : i32
    %c0_i32_1 = arith.constant 0 : i32
    return %arg0, %c0_i32, %arg1, %c0_i32_0 : i32, i32, i32, i32
  }
}

</mosaic_0001>

<llo_original>
// kernel: tpu_custom_call.1
$region0: #{tpu_custom_call.1}
  #allocation0 [shape = 'u32[]', space=smem, size = 0x4, offset = 0x4, fixed_abs, tag = 'smem constant byte address 0x4 - core index']
  #allocation1 [shape = 'u32[144,128]{1,0:T(1,128)}', space=vmem, size = 0x12000, scoped, tag = 'internal scratch']
  %s0 = inlined_call_operand.vmem [shape: s32[16,1], index: 0, kind: input, shape index: {}]
  %s1 = inlined_call_operand.vmem [shape: s32[1,16], index: 1, kind: input, shape index: {}]
  %s2 = inlined_call_operand.hbm [shape: s32[2,1,16,16], index: 2, kind: output, shape index: {}]
  %s3 = sld [smem:[#allocation0]]
  $region41: #{tpu_custom_call.1} parent=0
    _
  %s5 = ssub.s32 1, %s3
  %s6 = scalar_select 0, %s5, %s3
  $region1: #{tpu_custom_call.1} parent=0
    #allocation2 [shape = 'u8[8192]{0}', space=vmem, size = 0x2000, scoped, tag = 'output window, operand 0']
    #allocation3 [shape = 's32[2]{0}', space=sflag, size = 0x8, scoped, tag = 'scoped memory for tpu_custom_call.1']
    %7 = vsyncpa [#allocation3], 0
    %s8 = scalar_lea.sflag [#allocation3], 1
    %9 = vsyncpa %s8, 0
    loop: start=0, step=1, limit=6
    $region2: #{tpu_custom_call.1} parent=1 // loop_pre_header
      _
    $region3: #{tpu_custom_call.1} parent=1 // loop_header
      %s11 = sphi 0, %s15
      %p12 = scmp.ge.s32.totalorder %s11, 6
      %s18 = sphi 0, %s30
      %s19 = sphi 0, %s26
      %s20 = sphi 0, %s18
      %s21 = sphi 0, %s19
      %s22 = sphi 0, %s20
      %s23 = sphi 0, %s21
      %s31 = sphi 0, %s31
      %s33 = sphi 0, %s31
      %s34 = sphi 0, %s33
      %s48 = sphi 0, %s34
      %s52 = sphi 0, %s52
      %s54 = sphi 0, %s52
      %s55 = sphi 0, %s54
      %s69 = sphi 0, %s55
      %s77 = sphi 0, %s79
      %s80 = sphi 0, %s77
      %s81 = sphi 0, %s80
      %s97 = sphi 0, %s81
    $region4: #{tpu_custom_call.1} parent=1 // loop_header_branch
      %14 = sbr.rel (%p12) target = $region8
    $region5: #{tpu_custom_call.1} parent=1 // loop_body
      %s16 = ssub.s32 %s11, 1
      %s17 = ssub.s32 %s11, 2
      %s24 = sadd.s32 1, %s19
      %p25 = scmp.ge.s32.totalorder %s24, 2
      %s26 = scalar_select %p25, 0, %s24
      %s27 = sadd.s32 1, %s18
      %s28 = scalar_select %p25, %s27, %s18
      %p29 = scmp.ge.s32.totalorder %s28, 2
      %s30 = scalar_select %p29, 0, %s28
      %s32 = sadd.s32 %s31, 1
      %p35 = scmp.eq.s32.totalorder %s11, 3
      %p36 = scmp.ne.s32.totalorder %s31, %s33
      %p37 = scmp.eq.s32.totalorder %s11, 0
      %p38 = por %p36, %p37
      %p39 = scmp.ne.s32.totalorder %s31, %s33
      %p40 = scmp.eq.s32.totalorder %s16, 3
      %p41 = por %p39, %p40
      %p42 = scmp.ne.s32.totalorder %s33, %s34
      %p43 = scmp.eq.s32.totalorder %s16, 0
      %p44 = por %p42, %p43
      %p45 = scmp.ne.s32.totalorder %s33, %s34
      %p46 = scmp.eq.s32.totalorder %s17, 3
      %p47 = por %p45, %p46
      %p49 = scmp.ne.s32.totalorder %s34, %s48
      %p50 = scmp.eq.s32.totalorder %s17, 0
      %p51 = por %p49, %p50
      %s53 = sadd.s32 %s52, 1
      %p56 = scmp.eq.s32.totalorder %s11, 3
      %p57 = scmp.ne.s32.totalorder %s52, %s54
      %p58 = scmp.eq.s32.totalorder %s11, 0
      %p59 = por %p57, %p58
      %p60 = scmp.ne.s32.totalorder %s52, %s54
      %p61 = scmp.eq.s32.totalorder %s16, 3
      %p62 = por %p60, %p61
      %p63 = scmp.ne.s32.totalorder %s54, %s55
      %p64 = scmp.eq.s32.totalorder %s16, 0
      %p65 = por %p63, %p64
      %p66 = scmp.ne.s32.totalorder %s54, %s55
      %p67 = scmp.eq.s32.totalorder %s17, 3
      %p68 = por %p66, %p67
      %p70 = scmp.ne.s32.totalorder %s55, %s69
      %p71 = scmp.eq.s32.totalorder %s17, 0
      %p72 = por %p70, %p71
      %s73 = ssub.s32 %s18, %s30
      %s74 = ssub.s32 %s19, %s26
      %s75 = sor.u32 %s73, %s74
      %p76 = scmp.eq.s32.totalorder %s75, 0
      %s78 = sadd.s32 %s77, 1
      %s79 = scalar_select %p76, %s77, %s78
      %p82 = pneg %p76
      %p83 = scmp.eq.s32.totalorder %s11, 3
      %p84 = por %p82, %p83
      %p85 = scmp.ne.s32.totalorder %s77, %s80
      %p86 = scmp.eq.s32.totalorder %s11, 0
      %p87 = por %p85, %p86
      %p88 = scmp.ne.s32.totalorder %s77, %s80
      %p89 = scmp.eq.s32.totalorder %s16, 3
      %p90 = por %p88, %p89
      %p91 = scmp.ne.s32.totalorder %s80, %s81
      %p92 = scmp.eq.s32.totalorder %s16, 0
      %p93 = por %p91, %p92
      %p94 = scmp.ne.s32.totalorder %s80, %s81
      %p95 = scmp.eq.s32.totalorder %s17, 3
      %p96 = por %p94, %p95
      %p98 = scmp.ne.s32.totalorder %s81, %s97
      %p99 = scmp.eq.s32.totalorder %s17, 0
      %p100 = por %p98, %p99
      %p101 = scmp.le.s32.totalorder 1, %s11
      %p102 = scmp.lt.s32.totalorder %s11, 5
      %p103 = pnand %p101, %p102
      %p104 = pneg %p103
      // Predicated region
      $region9: #{tpu_custom_call.1} parent=5 // pred_check
        _
      $region10: #{tpu_custom_call.1} parent=5 // pred_check_branch
        %106 = sbr.rel (%p103) target = $region12
      $region11: #{tpu_custom_call.1} parent=5 // pred_region
        %s107 = ssub.s32 %s11, 1
        // Predicated region
        $region13: #{tpu_custom_call.1} parent=11 // pred_check
          %p108 = pneg %p44
        $region14: #{tpu_custom_call.1} parent=11 // pred_check_branch
          %110 = sbr.rel (%p108) target = $region16
        $region15: #{tpu_custom_call.1} parent=11 // pred_region
          _
        $region16: #{tpu_custom_call.1} parent=11 // pred_fallthru
          _
        // Predicated region
        $region17: #{tpu_custom_call.1} parent=11 // pred_check
          %p111 = pneg %p65
        $region18: #{tpu_custom_call.1} parent=11 // pred_check_branch
          %113 = sbr.rel (%p111) target = $region20
        $region19: #{tpu_custom_call.1} parent=11 // pred_region
          _
        $region20: #{tpu_custom_call.1} parent=11 // pred_fallthru
          _
      $region12: #{tpu_custom_call.1} parent=5 // pred_fallthru
        _
      %p114 = scmp.lt.s32.totalorder %s11, 4
      // Predicated region
      $region21: #{tpu_custom_call.1} parent=5 // pred_check
        %p115 = pneg %p114
      $region22: #{tpu_custom_call.1} parent=5 // pred_check_branch
        %117 = sbr.rel (%p115) target = $region24
      $region23: #{tpu_custom_call.1} parent=5 // pred_region
        _
      $region24: #{tpu_custom_call.1} parent=5 // pred_fallthru
        _
      %p118 = scmp.le.s32.totalorder 1, %s11
      %p119 = scmp.lt.s32.totalorder %s11, 5
      %p120 = pnand %p118, %p119
      %p121 = pneg %p120
      // Predicated region
      $region25: #{tpu_custom_call.1} parent=5 // pred_check
        _
      $region26: #{tpu_custom_call.1} parent=5 // pred_check_branch
        %123 = sbr.rel (%p120) target = $region28
      $region27: #{tpu_custom_call.1} parent=5 // pred_region
        %s124 = ssub.s32 %s11, 1
        %p125 = pneg %p44
        %p126 = pneg %p41
        %p127 = pneg %p65
        %p128 = pneg %p62
        %p129 = pneg %p93
        %p130 = pneg %p90
        %s131 = sand.u32 %s80, 1
        %s132 = scalar_lea.sflag [#allocation3], %s131
        %s133 = sand.u32 %s80, 1
        %s134 = smul.addr %s133, 8
        %s135 = scalar_lea.vmem [#allocation2], %s134
        %s136 = smul.u32 %s21, 8
        %s137 = scalar_lea.vmem %s0, %s136
        %v138 = vld [vmem:[%s137] sm:$0xff]
        %v139 = vld [vmem:[%s1] sm:$0x1]
        %140 = vset.pattern.permute.xlu0 0
        %141 = vperm.xlu0 %140, %v138
        %v142 = vpop.permute.xlu0 %141
        %v143 = vlaneseq
        %v144 = vshrl.u32 %v143, 7
        %v145 = vsub.s32 0, %v144
        %v146 = vrot.slane %v139, %v145
        %v147 = vadd.s32 %v142, %v146
        %vm148 = vcmask 130048
        %149 = vst.msk [vmem:[%s135] sm:$0xff] %vm148, %v147
        %s150 = sand.u32 %s80, 1
        %s151 = scalar_lea.sflag [#allocation3], %s150
        %s152 = sand.u32 %s80, 1
        %s153 = smul.addr %s152, 8
        %s154 = scalar_lea.vmem [#allocation2], %s153
        // Predicated region
        $region29: #{tpu_custom_call.1} parent=27 // pred_check
          %p155 = pneg %p90
        $region30: #{tpu_custom_call.1} parent=27 // pred_check_branch
          %157 = sbr.rel (%p155) target = $region32
        $region31: #{tpu_custom_call.1} parent=27 // pred_region
          %s159 = ssub.s32 128, 128
          %160 = vsyncadd %s151, %s159
          %s161 = smul.addr %s20, 2
          %s162 = sadd.s32 %s21, %s161
          %s163 = smul.addr %s162, 128
          %s164 = scalar_lea.hbm %s2, %s163
          %s166 = sshll.u32 %s154, 4
          %s167 = int_to_ptr.vmem [resolvable:$true] %s166
          %169 = dma.vmem_to_hbm [thread:$0]  %s167, 128, %s164, %s151
        $region32: #{tpu_custom_call.1} parent=27 // pred_fallthru
          _
      $region28: #{tpu_custom_call.1} parent=5 // pred_fallthru
        _
      %p170 = scmp.le.s32.totalorder 2, %s11
      // Predicated region
      $region33: #{tpu_custom_call.1} parent=5 // pred_check
        %p171 = pneg %p170
      $region34: #{tpu_custom_call.1} parent=5 // pred_check_branch
        %173 = sbr.rel (%p171) target = $region36
      $region35: #{tpu_custom_call.1} parent=5 // pred_region
        %s174 = ssub.s32 %s11, 2
        // Predicated region
        $region37: #{tpu_custom_call.1} parent=35 // pred_check
          %p175 = pneg %p96
        $region38: #{tpu_custom_call.1} parent=35 // pred_check_branch
          %177 = sbr.rel (%p175) target = $region40
        $region39: #{tpu_custom_call.1} parent=35 // pred_region
          %s178 = sand.u32 %s81, 1
          %s179 = scalar_lea.sflag [#allocation3], %s178
          %s180 = sand.u32 %s81, 1
          %s181 = smul.addr %s180, 8
          %s182 = scalar_lea.vmem [#allocation2], %s181
          %183 = dma.done %s179, 128
        $region40: #{tpu_custom_call.1} parent=35 // pred_fallthru
          _
      $region36: #{tpu_custom_call.1} parent=5 // pred_fallthru
        _
    $region6: #{tpu_custom_call.1} parent=1 // loop_footer
      %s15 = sadd.s32 1, %s11
    $region7: #{tpu_custom_call.1} parent=1 // loop_footer_branch
      %10 = sbr.rel target = $region3
    $region8: #{tpu_custom_call.1} parent=1 // loop_exit
      _
    %184 = vsyncpa [#allocation3], 1
    %s185 = scalar_lea.sflag [#allocation3], 1
    %186 = vsyncpa %s185, 1

</llo_original>
